<compile_context>
chip_gen: v6e
topology: v6e:2x2x1
jax: 0.10.0
libtpu: 0.0.40
codegen_flags: <defaults>
</compile_context>

<pallas_src>
import jax
import jax.numpy as jnp
from jax import lax
from jax.experimental import pallas as pl
from jax.experimental.pallas import tpu as pltpu


def _critic_kernel(x_ref, w1_ref, b1_ref, w2_ref, b2_ref, w3_ref, b3_ref,
                   out_ref):
    # x_ref:  (TB, n_states) f32   batch tile (batch sublanes, feats lanes)
    # w1_ref: (H, n_states)  bf16  PyTorch (out, in) layout
    # b1_ref: (H, 1)         f32
    # w2_ref: (H, H)         bf16  (out, in)
    # b2_ref: (H, 1)         f32
    # w3_ref: (H, 1)         f32   column (transposed PyTorch (1, H))
    # b3_ref: (1, 1)         f32
    # out_ref:(1, TB)        f32   lane-dense value row for this batch tile

    x_bf = x_ref[...].astype(jnp.bfloat16)                   # MXU operand

    # Layer 1: h1^T = ReLU(W1 @ x^T + b1)  -> (H, TB), batch stays on lanes.
    # NT dot_general contracting the shared n_states axis; f32 accumulate.
    h1 = lax.dot_general(
        w1_ref[...], x_bf,
        dimension_numbers=(((1,), (1,)), ((), ())),
        preferred_element_type=jnp.float32)
    h1 = jnp.maximum(h1 + b1_ref[...], 0.0)                  # f32 VPU

    # Layer 2: h2^T = ReLU(W2 @ h1^T + b2) -> (H, TB), bf16 MXU, f32 acc.
    h2 = jnp.dot(w2_ref[...], h1.astype(jnp.bfloat16),
                 preferred_element_type=jnp.float32)
    h2 = jnp.maximum(h2 + b2_ref[...], 0.0)

    # Layer 3 (H -> 1) off the MXU: f32 VPU multiply + sublane (XLU) reduce.
    v = jnp.sum(h2 * w3_ref[...], axis=0, keepdims=True) + b3_ref[...]

    out_ref[...] = v.astype(out_ref.dtype)                   # lane-dense store


def _padded_tile_bytes(rows, cols, elem_bytes):
    """Rough VMEM footprint of a (rows, cols) tile padded to (8, 128)."""
    return ((rows + 7) // 8 * 8) * ((cols + 127) // 128 * 128) * elem_bytes


def critic_forward(state, params):
    """Fused 3-layer MLP critic. state: (B, n_states) f32 -> (B, 1) f32."""
    w1, b1, w2, b2, w3, b3 = params
    B, n_states = state.shape
    H = w1.shape[0]

    # MXU operands in bf16 (in production, pre-cast once outside the step).
    w1_bf = w1.astype(jnp.bfloat16)
    w2_bf = w2.astype(jnp.bfloat16)

    # --- Batch tile selection -------------------------------------------
    # Large lane-dense tiles amortize the ~0.35us/step overhead, but keep the
    # grid >= 2 steps whenever possible so v7x's second TensorCore gets work.
    TB_max = 1024 if H <= 512 else 512
    B128 = ((B + 127) // 128) * 128
    if B128 <= 128:
        TB = 128                                   # tiny batch: single tile
    else:
        TB = min(TB_max, ((B128 // 2 + 127) // 128) * 128)   # >= 2 grid steps
    B_pad = ((B + TB - 1) // TB) * TB
    if B_pad != B:                                  # pad only when needed
        state = jnp.pad(state, ((0, B_pad - B), (0, 0)))
    grid = (B_pad // TB,)

    # --- VMEM budget ------------------------------------------------------
    weights_vmem = (_padded_tile_bytes(H, n_states, 2)      # w1 bf16
                    + _padded_tile_bytes(H, H, 2)            # w2 bf16
                    + 3 * _padded_tile_bytes(H, 1, 4)        # b1, b2, w3 f32
                    + _padded_tile_bytes(1, 1, 4))           # b3
    io_vmem = 2 * _padded_tile_bytes(TB, n_states, 4) \
        + 2 * _padded_tile_bytes(1, TB, 4)                   # dbl-buffered x/out
    act_vmem = 3 * _padded_tile_bytes(H, TB, 4)              # h1, h1_bf16, h2
    vmem_est = 2 * (weights_vmem + io_vmem + act_vmem) + (8 << 20)
    vmem_limit = int(min(100 << 20, max(32 << 20, vmem_est)))

    # Advisory cost for the XLA scheduler.
    flops = 2 * B_pad * (n_states * H + H * H + H)
    bytes_accessed = (4 * (B_pad * n_states + b1.size + b2.size
                           + w3.size + b3.size + B_pad)
                      + 2 * (w1.size + w2.size))

    # Weights/biases: full block, constant index map, single-buffered.
    def resident(a):
        return pl.BlockSpec(a.shape, lambda i: (0, 0),
                            pipeline_mode=pl.Buffered(1))

    out = pl.pallas_call(
        _critic_kernel,
        out_shape=jax.ShapeDtypeStruct((1, B_pad), jnp.float32),
        grid_spec=pltpu.PrefetchScalarGridSpec(
            num_scalar_prefetch=0,
            grid=grid,
            in_specs=[
                pl.BlockSpec((TB, n_states), lambda i: (i, 0)),   # state tile
                resident(w1_bf), resident(b1),
                resident(w2_bf), resident(b2),
                resident(w3), resident(b3),
            ],
            out_specs=pl.BlockSpec((1, TB), lambda i: (0, i)),    # lane-dense
        ),
        compiler_params=pltpu.CompilerParams(
            dimension_semantics=("parallel",),                    # v7x 2 TCs
            vmem_limit_bytes=vmem_limit),
        cost_estimate=pl.CostEstimate(
            flops=flops, transcendentals=0, bytes_accessed=bytes_accessed),
    )(state, w1_bf, b1, w2_bf, b2, w3, b3)

    # (1, B_pad) lane-dense slab -> (B, 1) column; drop the padded tail.
    return out[0, :B].reshape(B, 1)


def init_critic_params(key, n_states, hidden_size):
    """Deterministic init mirroring nn.Linear: U(-1/sqrt(fan_in), +1/sqrt(fan_in)).

    Layouts expected by the kernel:
      w1: (H, n_states), b1: (H, 1)      -- PyTorch (out, in) weight layout
      w2: (H, H),        b2: (H, 1)
      w3: (H, 1),        b3: (1, 1)      -- w3 is PyTorch (1, H) transposed
    """
    k1, k2, k3, k4, k5, k6 = jax.random.split(key, 6)

    def uniform_linear(kw, kb, fan_in, fan_out):
        bound = 1.0 / float(fan_in) ** 0.5
        w = jax.random.uniform(kw, (fan_out, fan_in), jnp.float32, -bound, bound)
        b = jax.random.uniform(kb, (fan_out, 1), jnp.float32, -bound, bound)
        return w, b

    w1, b1 = uniform_linear(k1, k2, n_states, hidden_size)
    w2, b2 = uniform_linear(k3, k4, hidden_size, hidden_size)
    w3_pt, b3 = uniform_linear(k5, k6, hidden_size, 1)   # w3_pt: (1, H)
    w3 = w3_pt.T                                          # (H, 1) column
    return (w1, b1, w2, b2, w3, b3)


def _reference_forward_f32(state, params):
    w1, b1, w2, b2, w3, b3 = params
    h1 = jnp.maximum(state @ w1.T + b1.T, 0.0)
    h2 = jnp.maximum(h1 @ w2.T + b2.T, 0.0)
    return h2 @ w3 + b3


def _reference_forward_bf16(state, params):
    """Mirrors the kernel's bf16-operand / f32-accumulate arithmetic."""
    w1, b1, w2, b2, w3, b3 = params
    bf = jnp.bfloat16
    h1 = jnp.maximum(
        jnp.dot(state.astype(bf), w1.astype(bf).T,
                preferred_element_type=jnp.float32) + b1.T, 0.0)
    h2 = jnp.maximum(
        jnp.dot(h1.astype(bf), w2.astype(bf).T,
                preferred_element_type=jnp.float32) + b2.T, 0.0)
    return h2 @ w3 + b3


if __name__ == "__main__":
    n_states = 8       # small robot state vector
    hidden_size = 32
    batch = 8

    key = jax.random.PRNGKey(0)
    kx, kp = jax.random.split(key)
    state = jax.random.normal(kx, (batch, n_states), jnp.float32)
    params = init_critic_params(kp, n_states, hidden_size)

    value = critic_forward(state, params)
    value = jax.block_until_ready(value)

    assert value.shape == (batch, 1)

    # Tight check against a bf16-matched reference, loose against pure f32.
    ref_bf16 = _reference_forward_bf16(state, params)
    ref_f32 = _reference_forward_f32(state, params)
    assert jnp.allclose(value, ref_bf16, atol=2e-3, rtol=2e-3), (
        f"bf16-ref max abs err {jnp.max(jnp.abs(value - ref_bf16))}")
    assert jnp.allclose(value, ref_f32, atol=3e-2, rtol=3e-2), (
        f"f32-ref max abs err {jnp.max(jnp.abs(value - ref_f32))}")

    print("KERNEL_OK")
</pallas_src>

<mosaic_0001>
module attributes {stable_mosaic.version = 11 : i64} {
  func.func @_critic_kernel(%arg0: i32, %arg1: memref<128x8xf32, #tpu.memory_space<vmem>>, %arg2: memref<32x8xbf16, #tpu.memory_space<vmem>>, %arg3: memref<32x1xf32, #tpu.memory_space<vmem>>, %arg4: memref<32x32xbf16, #tpu.memory_space<vmem>>, %arg5: memref<32x1xf32, #tpu.memory_space<vmem>>, %arg6: memref<32x1xf32, #tpu.memory_space<vmem>>, %arg7: memref<1x1xf32, #tpu.memory_space<vmem>>, %arg8: memref<1x128xf32, #tpu.memory_space<vmem>>) attributes {dimension_semantics = [#tpu.dimension_semantics<parallel>], iteration_bounds = array<i64: 1>, scalar_prefetch = 0 : i64, scratch_operands = 0 : i64, tpu.core_type = #tpu.core_type<tc>, window_params = [{transform_indices = @transform_0, window_bounds = array<i64: 128, 8>}, {pipeline_mode = #tpu.pipeline_mode<synchronous>, transform_indices = @transform_1, window_bounds = array<i64: 32, 8>}, {pipeline_mode = #tpu.pipeline_mode<synchronous>, transform_indices = @transform_2, window_bounds = array<i64: 32, 1>}, {pipeline_mode = #tpu.pipeline_mode<synchronous>, transform_indices = @transform_3, window_bounds = array<i64: 32, 32>}, {pipeline_mode = #tpu.pipeline_mode<synchronous>, transform_indices = @transform_4, window_bounds = array<i64: 32, 1>}, {pipeline_mode = #tpu.pipeline_mode<synchronous>, transform_indices = @transform_5, window_bounds = array<i64: 32, 1>}, {pipeline_mode = #tpu.pipeline_mode<synchronous>, transform_indices = @transform_6, window_bounds = array<i64: 1, 1>}, {transform_indices = @transform_7, window_bounds = array<i64: 1, 128>}]} {
    %c0 = arith.constant 0 : index
    %c0_0 = arith.constant 0 : index
    %0 = vector.load %arg1[%c0, %c0_0] : memref<128x8xf32, #tpu.memory_space<vmem>>, vector<128x8xf32>
    %1 = arith.truncf %0 : vector<128x8xf32> to vector<128x8xbf16>
    %c0_1 = arith.constant 0 : index
    %c0_2 = arith.constant 0 : index
    %2 = vector.load %arg2[%c0_1, %c0_2] : memref<32x8xbf16, #tpu.memory_space<vmem>>, vector<32x8xbf16>
    %cst = arith.constant dense<0.000000e+00> : vector<32x128xf32>
    %3 = tpu.matmul %2, %1, %cst {dimension_numbers = #tpu.dot_dimension_numbers<[1], [1], [0], [0], [0, 0, 1, 0], [], []>} : vector<32x8xbf16>, vector<128x8xbf16>, vector<32x128xf32> -> vector<32x128xf32>
    %c0_3 = arith.constant 0 : index
    %c0_4 = arith.constant 0 : index
    %4 = vector.load %arg3[%c0_3, %c0_4] : memref<32x1xf32, #tpu.memory_space<vmem>>, vector<32x1xf32>
    %5 = vector.broadcast %4 : vector<32x1xf32> to vector<32x128xf32>
    %6 = arith.addf %3, %5 : vector<32x128xf32>
    %cst_5 = arith.constant 0.000000e+00 : f32
    %7 = vector.broadcast %cst_5 : f32 to vector<32x128xf32>
    %8 = arith.maximumf %6, %7 : vector<32x128xf32>
    %c0_6 = arith.constant 0 : index
    %c0_7 = arith.constant 0 : index
    %9 = vector.load %arg4[%c0_6, %c0_7] : memref<32x32xbf16, #tpu.memory_space<vmem>>, vector<32x32xbf16>
    %10 = arith.truncf %8 : vector<32x128xf32> to vector<32x128xbf16>
    %cst_8 = arith.constant dense<0.000000e+00> : vector<32x128xf32>
    %11 = tpu.matmul %9, %10, %cst_8 {dimension_numbers = #tpu.dot_dimension_numbers<[1], [0], [0], [1], [0, 0, 1, 1], [], []>} : vector<32x32xbf16>, vector<32x128xbf16>, vector<32x128xf32> -> vector<32x128xf32>
    %c0_9 = arith.constant 0 : index
    %c0_10 = arith.constant 0 : index
    %12 = vector.load %arg5[%c0_9, %c0_10] : memref<32x1xf32, #tpu.memory_space<vmem>>, vector<32x1xf32>
    %13 = vector.broadcast %12 : vector<32x1xf32> to vector<32x128xf32>
    %14 = arith.addf %11, %13 : vector<32x128xf32>
    %cst_11 = arith.constant 0.000000e+00 : f32
    %15 = vector.broadcast %cst_11 : f32 to vector<32x128xf32>
    %16 = arith.maximumf %14, %15 : vector<32x128xf32>
    %c0_12 = arith.constant 0 : index
    %c0_13 = arith.constant 0 : index
    %17 = vector.load %arg6[%c0_12, %c0_13] : memref<32x1xf32, #tpu.memory_space<vmem>>, vector<32x1xf32>
    %18 = vector.broadcast %17 : vector<32x1xf32> to vector<32x128xf32>
    %19 = arith.mulf %16, %18 : vector<32x128xf32>
    %cst_14 = arith.constant dense<0.000000e+00> : vector<128xf32>
    %20 = vector.multi_reduction <add>, %19, %cst_14 [0] : vector<32x128xf32> to vector<128xf32>
    %21 = vector.shape_cast %20 : vector<128xf32> to vector<1x128xf32>
    %c0_15 = arith.constant 0 : index
    %c0_16 = arith.constant 0 : index
    %22 = vector.load %arg7[%c0_15, %c0_16] : memref<1x1xf32, #tpu.memory_space<vmem>>, vector<1x1xf32>
    %23 = vector.broadcast %22 : vector<1x1xf32> to vector<1x128xf32>
    %24 = arith.addf %21, %23 : vector<1x128xf32>
    %c0_17 = arith.constant 0 : index
    %c0_18 = arith.constant 0 : index
    %25 = vector.load %arg8[%c0_17, %c0_18] : memref<1x128xf32, #tpu.memory_space<vmem>>, vector<1x128xf32>
    tpu.vector_store %arg8[%c0_17, %c0_18], %24 {strides = array<i32>} : memref<1x128xf32, #tpu.memory_space<vmem>>, vector<1x128xf32>,
    return
  }
  func.func @transform_0(%arg0: i32) -> (i32, i32) {
    %c0_i32 = arith.constant 0 : i32
    %c0_i32_0 = arith.constant 0 : i32
    return %arg0, %c0_i32 : i32, i32
  }
  func.func @transform_1(%arg0: i32) -> (i32, i32) {
    %c0_i32 = arith.constant 0 : i32
    %c0_i32_0 = arith.constant 0 : i32
    %c0_i32_1 = arith.constant 0 : i32
    return %c0_i32, %c0_i32_0 : i32, i32
  }
  func.func @transform_2(%arg0: i32) -> (i32, i32) {
    %c0_i32 = arith.constant 0 : i32
    %c0_i32_0 = arith.constant 0 : i32
    %c0_i32_1 = arith.constant 0 : i32
    return %c0_i32, %c0_i32_0 : i32, i32
  }
  func.func @transform_3(%arg0: i32) -> (i32, i32) {
    %c0_i32 = arith.constant 0 : i32
    %c0_i32_0 = arith.constant 0 : i32
    %c0_i32_1 = arith.constant 0 : i32
    return %c0_i32, %c0_i32_0 : i32, i32
  }
  func.func @transform_4(%arg0: i32) -> (i32, i32) {
    %c0_i32 = arith.constant 0 : i32
    %c0_i32_0 = arith.constant 0 : i32
    %c0_i32_1 = arith.constant 0 : i32
    return %c0_i32, %c0_i32_0 : i32, i32
  }
  func.func @transform_5(%arg0: i32) -> (i32, i32) {
    %c0_i32 = arith.constant 0 : i32
    %c0_i32_0 = arith.constant 0 : i32
    %c0_i32_1 = arith.constant 0 : i32
    return %c0_i32, %c0_i32_0 : i32, i32
  }
  func.func @transform_6(%arg0: i32) -> (i32, i32) {
    %c0_i32 = arith.constant 0 : i32
    %c0_i32_0 = arith.constant 0 : i32
    %c0_i32_1 = arith.constant 0 : i32
    return %c0_i32, %c0_i32_0 : i32, i32
  }
  func.func @transform_7(%arg0: i32) -> (i32, i32) {
    %c0_i32 = arith.constant 0 : i32
    %c0_i32_0 = arith.constant 0 : i32
    return %c0_i32, %arg0 : i32, i32
  }
}

</mosaic_0001>

<llo_original>
// kernel: tpu_custom_call.1
$region0: #{tpu_custom_call.1}
  #allocation0 [shape = 'u32[]', space=smem, size = 0x4, offset = 0x4, fixed_abs, tag = 'smem constant byte address 0x4 - core index']
  #allocation1 [shape = 'u32[144,128]{1,0:T(1,128)}', space=vmem, size = 0x12000, scoped, tag = 'internal scratch']
  #allocation2 [shape = 'f32[1,1]{1,0:T(1,128)S(1)}', space=vmem, size = 0x200, scoped, tag = 'scoped memory for tpu_custom_call.1']
  %s0 = inlined_call_operand.vmem [shape: f32[128,8], index: 0, kind: input, shape index: {}]
  %s1 = inlined_call_operand.vmem [shape: bf16[32,8], index: 1, kind: input, shape index: {}]
  %s2 = inlined_call_operand.vmem [shape: f32[32,1], index: 2, kind: input, shape index: {}]
  %s3 = inlined_call_operand.vmem [shape: bf16[32,32], index: 3, kind: input, shape index: {}]
  %s4 = inlined_call_operand.vmem [shape: f32[32,1], index: 4, kind: input, shape index: {}]
  %s5 = inlined_call_operand.vmem [shape: f32[32,1], index: 5, kind: input, shape index: {}]
  %s6 = inlined_call_operand.<no memory space> [shape: f32[1,1], index: 6, kind: input, shape index: {}]
  %s7 = inlined_call_operand.hbm [shape: f32[1,128], index: 7, kind: output, shape index: {}]
  %s8 = sld [smem:[#allocation0]]
  $region38: #{tpu_custom_call.1} parent=0
    _
  %s10 = ssub.s32 1, %s8
  %s11 = scalar_select 0, %s10, %s8
  %v12 = vstv %s6
  %13 = vst [vmem:[#allocation2] sm:$0x1] %v12
  $region1: #{tpu_custom_call.1} parent=0
    #allocation3 [shape = 'u8[512]{0}', space=vmem, size = 0x400, scoped, tag = 'output window, operand 0, single buffered']
    #allocation4 [shape = 's32[1]{0}', space=sflag, size = 0x4, scoped, tag = 'scoped memory for tpu_custom_call.1']
    %14 = vsyncpa [#allocation4], 0
    // Predicated region
    $region2: #{tpu_custom_call.1} parent=1 // pred_check
      _
    $region3: #{tpu_custom_call.1} parent=1 // pred_check_branch
      %16 = sbr.rel (0) target = $region5
    $region4: #{tpu_custom_call.1} parent=1 // pred_region
      _
    $region5: #{tpu_custom_call.1} parent=1 // pred_fallthru
      _
    // Predicated region
    $region6: #{tpu_custom_call.1} parent=1 // pred_check
      _
    $region7: #{tpu_custom_call.1} parent=1 // pred_check_branch
      %18 = sbr.rel (0) target = $region9
    $region8: #{tpu_custom_call.1} parent=1 // pred_region
      _
    $region9: #{tpu_custom_call.1} parent=1 // pred_fallthru
      _
    // Predicated region
    $region10: #{tpu_custom_call.1} parent=1 // pred_check
      _
    $region11: #{tpu_custom_call.1} parent=1 // pred_check_branch
      %20 = sbr.rel (0) target = $region13
    $region12: #{tpu_custom_call.1} parent=1 // pred_region
      _
    $region13: #{tpu_custom_call.1} parent=1 // pred_fallthru
      _
    // Predicated region
    $region14: #{tpu_custom_call.1} parent=1 // pred_check
      _
    $region15: #{tpu_custom_call.1} parent=1 // pred_check_branch
      %22 = sbr.rel (0) target = $region17
    $region16: #{tpu_custom_call.1} parent=1 // pred_region
      _
    $region17: #{tpu_custom_call.1} parent=1 // pred_fallthru
      _
    // Predicated region
    $region18: #{tpu_custom_call.1} parent=1 // pred_check
      _
    $region19: #{tpu_custom_call.1} parent=1 // pred_check_branch
      %24 = sbr.rel (0) target = $region21
    $region20: #{tpu_custom_call.1} parent=1 // pred_region
      _
    $region21: #{tpu_custom_call.1} parent=1 // pred_fallthru
      _
    // Predicated region
    $region22: #{tpu_custom_call.1} parent=1 // pred_check
      _
    $region23: #{tpu_custom_call.1} parent=1 // pred_check_branch
      %26 = sbr.rel (0) target = $region25
    $region24: #{tpu_custom_call.1} parent=1 // pred_region
      _
    $region25: #{tpu_custom_call.1} parent=1 // pred_fallthru
      _
    // Predicated region
    $region26: #{tpu_custom_call.1} parent=1 // pred_check
      _
    $region27: #{tpu_custom_call.1} parent=1 // pred_check_branch
      %28 = sbr.rel (0) target = $region29
    $region28: #{tpu_custom_call.1} parent=1 // pred_region
      _
    $region29: #{tpu_custom_call.1} parent=1 // pred_fallthru
      _
    %v30 = vld [vmem:[%s0] sm:$0xff]
    %v31 = vld [vmem:[%s0 + $0x8] sm:$0xff]
    %v32 = vld [vmem:[%s0 + $0x10] sm:$0xff]
    %v33 = vld [vmem:[%s0 + $0x18] sm:$0xff]
    %v34 = vld [vmem:[%s0 + $0x20] sm:$0xff]
    %v35 = vld [vmem:[%s0 + $0x28] sm:$0xff]
    %v36 = vld [vmem:[%s0 + $0x30] sm:$0xff]
    %v37 = vld [vmem:[%s0 + $0x38] sm:$0xff]
    %v38 = vld [vmem:[%s0 + $0x40] sm:$0xff]
    %v39 = vld [vmem:[%s0 + $0x48] sm:$0xff]
    %v40 = vld [vmem:[%s0 + $0x50] sm:$0xff]
    %v41 = vld [vmem:[%s0 + $0x58] sm:$0xff]
    %v42 = vld [vmem:[%s0 + $0x60] sm:$0xff]
    %v43 = vld [vmem:[%s0 + $0x68] sm:$0xff]
    %v44 = vld [vmem:[%s0 + $0x70] sm:$0xff]
    %v45 = vld [vmem:[%s0 + $0x78] sm:$0xff]
    %v46 = vpack.c.bf16 %v31, %v30
    %v47 = vpack.c.bf16 %v33, %v32
    %v48 = vpack.c.bf16 %v35, %v34
    %v49 = vpack.c.bf16 %v37, %v36
    %v50 = vpack.c.bf16 %v39, %v38
    %v51 = vpack.c.bf16 %v41, %v40
    %v52 = vpack.c.bf16 %v43, %v42
    %v53 = vpack.c.bf16 %v45, %v44
    %v54 = vld [vmem:[%s1] sm:$0xf]
    %v55 = vld [vmem:[%s1 + $0x4] sm:$0xf]
    %v56 = vld [vmem:[%s1 + $0x8] sm:$0xf]
    %v57 = vld [vmem:[%s1 + $0xc] sm:$0xf]
    %v58 = vld [vmem:[%s2] sm:$0xff]
    %v59 = vld [vmem:[%s2 + $0x8] sm:$0xff]
    %v60 = vld [vmem:[%s2 + $0x10] sm:$0xff]
    %v61 = vld [vmem:[%s2 + $0x18] sm:$0xff]
    %63 = vset.pattern.permute.xlu0 0
    %64 = vperm.xlu0 %63, %v58
    %v65 = vpop.permute.xlu0 %64
    %68 = vset.pattern.permute.xlu0 0
    %69 = vperm.xlu0 %68, %v59
    %v70 = vpop.permute.xlu0 %69
    %73 = vset.pattern.permute.xlu0 0
    %74 = vperm.xlu0 %73, %v60
    %v75 = vpop.permute.xlu0 %74
    %78 = vset.pattern.permute.xlu0 0
    %79 = vperm.xlu0 %78, %v61
    %v80 = vpop.permute.xlu0 %79
    %v86 = vunpack.c.l.b16 %v54
    %v87 = vunpack.c.l.b16 %v55
    %v88 = vunpack.c.l.b16 %v56
    %v89 = vunpack.c.l.b16 %v57
    %v90 = vpack.c.b16 %v87, %v86
    %v91 = vpack.c.b16 %v89, %v88
    %vm92 = vcmask 64512
    %v94 = vsel %vm92, %v90, 0
    %v97 = vsel %vm92, %v91, 0
    %v100 = vsel %vm92, %v46, 0
    %v103 = vsel %vm92, %v47, 0
    %v106 = vsel %vm92, %v48, 0
    %v109 = vsel %vm92, %v49, 0
    %v112 = vsel %vm92, %v50, 0
    %v115 = vsel %vm92, %v51, 0
    %v118 = vsel %vm92, %v52, 0
    %v121 = vsel %vm92, %v53, 0
    %123 = vmatprep.subr.bf16.mxu0 0
    %124 = vmatpush1.bf16.xpose.msra.mxu0 %v121
    %125 = vmatprep.subr.bf16.mxu0 0
    %126 = vmatpush1.bf16.xpose.msra.mxu0 %v118
    %127 = vmatprep.subr.bf16.mxu0 0
    %128 = vmatpush1.bf16.xpose.msra.mxu0 %v115
    %129 = vmatprep.subr.bf16.mxu0 0
    %130 = vmatpush1.bf16.xpose.msra.mxu0 %v112
    %131 = vmatprep.subr.bf16.mxu0 0
    %132 = vmatpush1.bf16.xpose.msra.mxu0 %v109
    %133 = vmatprep.subr.bf16.mxu0 0
    %134 = vmatpush1.bf16.xpose.msra.mxu0 %v106
    %135 = vmatprep.subr.bf16.mxu0 0
    %136 = vmatpush1.bf16.xpose.msra.mxu0 %v103
    %137 = vmatprep.subr.bf16.mxu0 0
    %138 = vmatpush1.bf16.xpose.msra.mxu0 %v100
    %139 = vmatprep.subr.bf16.mxu0 0
    %140 = vmatpush2.bf16.xpose.msra.mxu0 0
    %141 = vmatprep.subr.bf16.mxu0 0
    %142 = vmatpush2.bf16.xpose.msra.mxu0 0
    %143 = vmatprep.subr.bf16.mxu0 0
    %144 = vmatpush2.bf16.xpose.msra.mxu0 0
    %145 = vmatprep.subr.bf16.mxu0 0
    %146 = vmatpush2.bf16.xpose.msra.mxu0 0
    %147 = vmatprep.subr.bf16.mxu0 0
    %148 = vmatpush2.bf16.xpose.msra.mxu0 0
    %149 = vmatprep.subr.bf16.mxu0 0
    %150 = vmatpush2.bf16.xpose.msra.mxu0 0
    %151 = vmatprep.subr.bf16.mxu0 0
    %152 = vmatpush2.bf16.xpose.msra.mxu0 0
    %153 = vmatprep.subr.bf16.mxu0 0
    %154 = vmatpush2.bf16.xpose.msra.mxu0 0
    %155 = vmatprep.mubr.bf16.mxu0 0
    %156 = vmatmul.mubr.bf16.gmra.mxu0 %v94
    %v157 = vpop.f32.mrf.mxu0
    %v158 = vadd.f32 %v65, %v157
    %v159 = vpop.f32.mrf.mxu0
    %v160 = vpop.f32.mrf.mxu0
    %v161 = vadd.f32 %v70, %v160
    %v162 = vpop.f32.mrf.mxu0
    %163 = vmatprep.mubr.bf16.mxu0 0
    %164 = vmatmul.mubr.bf16.gmra.mxu0 %v97
    %v165 = vpop.f32.mrf.mxu0
    %v166 = vadd.f32 %v75, %v165
    %v167 = vpop.f32.mrf.mxu0
    %v168 = vpop.f32.mrf.mxu0
    %v169 = vadd.f32 %v80, %v168
    %v170 = vpop.f32.mrf.mxu0
    %171 = vdwg.mxu0
    %v172 = vmax.f32 %v158, 0.0
    %v173 = vmax.f32 %v161, 0.0
    %v174 = vmax.f32 %v166, 0.0
    %v175 = vmax.f32 %v169, 0.0
    %v176 = vld [vmem:[%s3] sm:$0xf]
    %v177 = vld [vmem:[%s3 + $0x4] sm:$0xf]
    %v178 = vld [vmem:[%s3 + $0x8] sm:$0xf]
    %v179 = vld [vmem:[%s3 + $0xc] sm:$0xf]
    %v180 = vpack.c.bf16 %v173, %v172
    %v181 = vpack.c.bf16 %v175, %v174
    %v182 = vld [vmem:[%s4] sm:$0xff]
    %v183 = vld [vmem:[%s4 + $0x8] sm:$0xff]
    %v184 = vld [vmem:[%s4 + $0x10] sm:$0xff]
    %v185 = vld [vmem:[%s4 + $0x18] sm:$0xff]
    %187 = vset.pattern.permute.xlu0 0
    %188 = vperm.xlu0 %187, %v182
    %v189 = vpop.permute.xlu0 %188
    %192 = vset.pattern.permute.xlu0 0
    %193 = vperm.xlu0 %192, %v183
    %v194 = vpop.permute.xlu0 %193
    %197 = vset.pattern.permute.xlu0 0
    %198 = vperm.xlu0 %197, %v184
    %v199 = vpop.permute.xlu0 %198
    %202 = vset.pattern.permute.xlu0 0
    %203 = vperm.xlu0 %202, %v185
    %v204 = vpop.permute.xlu0 %203
    %v210 = vunpack.c.l.b16 %v176
    %v211 = vunpack.c.l.b16 %v177
    %v212 = vunpack.c.l.b16 %v178
    %v213 = vunpack.c.l.b16 %v179
    %v214 = vpack.c.b16 %v211, %v210
    %v215 = vpack.c.b16 %v213, %v212
    %vm216 = vcmask 261120
    %v218 = vsel %vm216, %v214, 0
    %v221 = vsel %vm216, %v215, 0
    %223 = vmatprep.subr.bf16.mxu0 0
    %224 = vmatpush1.bf16.msra.mxu0 0
    %225 = vmatprep.subr.bf16.mxu0 0
    %226 = vmatpush1.bf16.msra.mxu0 0
    %227 = vmatprep.subr.bf16.mxu0 0
    %228 = vmatpush1.bf16.msra.mxu0 0
    %229 = vmatprep.subr.bf16.mxu0 0
    %230 = vmatpush1.bf16.msra.mxu0 0
    %231 = vmatprep.subr.bf16.mxu0 0
    %232 = vmatpush1.bf16.msra.mxu0 0
    %233 = vmatprep.subr.bf16.mxu0 0
    %234 = vmatpush1.bf16.msra.mxu0 0
    %235 = vmatprep.subr.bf16.mxu0 0
    %236 = vmatpush1.bf16.msra.mxu0 %v181
    %237 = vmatprep.subr.bf16.mxu0 0
    %238 = vmatpush1.bf16.msra.mxu0 %v180
    %239 = vmatprep.subr.bf16.mxu0 0
    %240 = vmatpush2.bf16.msra.mxu0 0
    %241 = vmatprep.subr.bf16.mxu0 0
    %242 = vmatpush2.bf16.msra.mxu0 0
    %243 = vmatprep.subr.bf16.mxu0 0
    %244 = vmatpush2.bf16.msra.mxu0 0
    %245 = vmatprep.subr.bf16.mxu0 0
    %246 = vmatpush2.bf16.msra.mxu0 0
    %247 = vmatprep.subr.bf16.mxu0 0
    %248 = vmatpush2.bf16.msra.mxu0 0
    %249 = vmatprep.subr.bf16.mxu0 0
    %250 = vmatpush2.bf16.msra.mxu0 0
    %251 = vmatprep.subr.bf16.mxu0 0
    %252 = vmatpush2.bf16.msra.mxu0 0
    %253 = vmatprep.subr.bf16.mxu0 0
    %254 = vmatpush2.bf16.msra.mxu0 0
    %255 = vmatprep.mubr.bf16.mxu0 0
    %256 = vmatmul.mubr.bf16.gmra.mxu0 %v218
    %v257 = vpop.f32.mrf.mxu0
    %v258 = vadd.f32 %v189, %v257
    %v259 = vpop.f32.mrf.mxu0
    %v260 = vpop.f32.mrf.mxu0
    %v261 = vadd.f32 %v194, %v260
    %v262 = vpop.f32.mrf.mxu0
    %263 = vmatprep.mubr.bf16.mxu0 0
    %264 = vmatmul.mubr.bf16.gmra.mxu0 %v221
    %v265 = vpop.f32.mrf.mxu0
    %v266 = vadd.f32 %v199, %v265
    %v267 = vpop.f32.mrf.mxu0
    %v268 = vpop.f32.mrf.mxu0
    %v269 = vadd.f32 %v204, %v268
    %v270 = vpop.f32.mrf.mxu0
    %271 = vdwg.mxu0
    %v272 = vmax.f32 %v258, 0.0
    %v273 = vmax.f32 %v261, 0.0
    %v274 = vmax.f32 %v266, 0.0
    %v275 = vmax.f32 %v269, 0.0
    %v276 = vld [vmem:[%s5] sm:$0xff]
    %v277 = vld [vmem:[%s5 + $0x8] sm:$0xff]
    %v278 = vld [vmem:[%s5 + $0x10] sm:$0xff]
    %v279 = vld [vmem:[%s5 + $0x18] sm:$0xff]
    %281 = vset.pattern.permute.xlu0 0
    %282 = vperm.xlu0 %281, %v276
    %v283 = vpop.permute.xlu0 %282
    %286 = vset.pattern.permute.xlu0 0
    %287 = vperm.xlu0 %286, %v277
    %v288 = vpop.permute.xlu0 %287
    %291 = vset.pattern.permute.xlu0 0
    %292 = vperm.xlu0 %291, %v278
    %v293 = vpop.permute.xlu0 %292
    %296 = vset.pattern.permute.xlu0 0
    %297 = vperm.xlu0 %296, %v279
    %v298 = vpop.permute.xlu0 %297
    %v300 = vmul.f32 %v272, %v283
    %v301 = vmul.f32 %v273, %v288
    %v302 = vmul.f32 %v274, %v293
    %v303 = vmul.f32 %v275, %v298
    %v304 = vadd.f32 %v300, %v301
    %v305 = vadd.f32 %v304, %v302
    %v306 = vadd.f32 %v305, %v303
    %v307 = vrot.slane %v306, 4
    %v308 = vadd.f32 %v306, %v307
    %v309 = vrot.slane %v308, 2
    %v310 = vadd.f32 %v308, %v309
    %v311 = vrot.slane %v310, 1
    %v312 = vadd.f32 %v310, %v311
    %v313 = vld [vmem:[#allocation2] sm:$0x1]
    %315 = vset.pattern.permute.xlu0 0
    %316 = vperm.xlu0 %315, %v313
    %v317 = vpop.permute.xlu0 %316
    %v319 = vlaneseq
    %v320 = vshrl.u32 %v319, 7
    %v321 = vsub.s32 0, %v320
    %v322 = vrot.slane %v317, %v321
    %v323 = vadd.f32 %v312, %v322
    %324 = vst [vmem:[#allocation3] sm:$0x1] %v323
    // Predicated region
    $region30: #{tpu_custom_call.1} parent=1 // pred_check
      _
    $region31: #{tpu_custom_call.1} parent=1 // pred_check_branch
      %326 = sbr.rel (0) target = $region33
    $region32: #{tpu_custom_call.1} parent=1 // pred_region
      %s328 = ssub.s32 16, 16
      %329 = vsyncadd [#allocation4], %s328
      %s331 = sshll.u32 [#allocation3], 4
      %s332 = int_to_ptr.vmem [resolvable:$true] %s331
      %334 = dma.vmem_to_hbm [thread:$0]  %s332, 16, %s7, [#allocation4]
    $region33: #{tpu_custom_call.1} parent=1 // pred_fallthru
      _
    // Predicated region
    $region34: #{tpu_custom_call.1} parent=1 // pred_check
      _
    $region35: #{tpu_custom_call.1} parent=1 // pred_check_branch
      %336 = sbr.rel (0) target = $region37
    $region36: #{tpu_custom_call.1} parent=1 // pred_region
      %337 = dma.done [#allocation4], 16
    $region37: #{tpu_custom_call.1} parent=1 // pred_fallthru
      _
    %338 = vsyncpa [#allocation4], 1

</llo_original>
